<compile_context>
chip_gen: v6e
topology: v6e:2x2x1
jax: 0.10.0
libtpu: 0.0.40
codegen_flags: <defaults>
</compile_context>

<pallas_src>
import functools

import jax
import jax.numpy as jnp
from jax.experimental import pallas as pl
from jax.experimental.pallas import tpu as pltpu


# --------------------------------------------------------------------------
# Fused kernel: (conv3x3 + folded-BN bias + ReLU) x 2, one batch element/step
# --------------------------------------------------------------------------
def _fused_doubleconv_kernel(xp_ref, r1_ref, r2_ref, b1_ref, b2_ref, o_ref,
                             y1_ref, *, H, W, Cin, C):
    """Shapes (per grid step, row-flattened NHWC):

    xp_ref: (1, H+2, (W+2)*Cin)   bf16  zero-padded input image
    r1_ref: (3, (W+2)*Cin, (W+2)*C) bf16  lowered stage-1 weights (BN folded);
                                          output columns include a zero border
    r2_ref: (3, (W+2)*C,   W*C)   bf16  lowered stage-2 weights (BN folded)
    b1_ref: (1, (W+2)*C)          f32   stage-1 bias tiled over w (zero border)
    b2_ref: (1, W*C)              f32   stage-2 bias tiled over w
    o_ref:  (1, H, W*C)           f32   lane-dense output block
    y1_ref: (H+2, (W+2)*C)        bf16  VMEM scratch: stage-1 act + zero halo
    """
    wp2 = (W + 2)

    # ---------------- Stage 1: conv + bias + ReLU -> VMEM scratch ----------
    acc1 = jnp.zeros((H, wp2 * C), dtype=jnp.float32)
    for dh in range(3):                       # 3 lane-dense MXU matmuls
        acc1 = acc1 + jnp.dot(xp_ref[0, dh:dh + H, :], r1_ref[dh],
                              preferred_element_type=jnp.float32)
    y1 = jnp.maximum(acc1 + b1_ref[...], 0.0)  # border w-columns stay exactly 0

    # Stage-1 activation + 1-pixel zero halo stays entirely in VMEM (fusion).
    y1_ref[...] = jnp.zeros_like(y1_ref)       # zero halo rows (and borders)
    y1_ref[1:H + 1, :] = y1.astype(y1_ref.dtype)

    # ---------------- Stage 2: conv + bias + ReLU -> output ----------------
    acc2 = jnp.zeros((H, W * C), dtype=jnp.float32)
    for dh in range(3):
        acc2 = acc2 + jnp.dot(y1_ref[dh:dh + H, :], r2_ref[dh],
                              preferred_element_type=jnp.float32)
    y2 = jnp.maximum(acc2 + b2_ref[...], 0.0)
    o_ref[...] = y2[None, :, :]                # unmasked lane-dense store


# --------------------------------------------------------------------------
# Wrapper-side (one-time, XLA) weight lowering and BN folding
# --------------------------------------------------------------------------
def _fold_bn(bn, eps=1e-5):
    scale = bn["gamma"] / jnp.sqrt(bn["var"] + eps)
    bias = bn["beta"] - bn["mean"] * scale
    return scale, bias


def _lower_conv_weights(w_hwio, width, pad_output):
    """Lower a 3x3 HWIO conv weight into 3 banded matrices (one per dh).

    Returns r of shape (3, (width+2)*Cin, Wout*Cout), Wout = width(+2 if
    pad_output), such that for the row-flattened padded input slab
    L_dh[h, w_in*Cin + ci] = xpad[h + dh, w_in, ci]:
        sum_dh L_dh @ r[dh]  ==  conv output rows flattened as (H, Wout*Cout).
    With pad_output=True the first/last Cout output columns are structurally
    zero (they become the W-halo of the next stage).
    """
    _, _, cin, cout = w_hwio.shape
    W = width
    w_in = jnp.arange(W + 2)[None, :, None]          # (1, W+2, 1)
    w_out = jnp.arange(W)[None, None, :]             # (1, 1,   W)
    dw = jnp.arange(3)[:, None, None]                # (3, 1,   1)
    sel = (w_in == w_out + dw).astype(w_hwio.dtype)  # (3, W+2, W)
    # r[dh, w_in, ci, w_out, co] = sum_dw sel[dw, w_in, w_out] * w[dh, dw, ci, co]
    r = jnp.einsum('dab,hdio->haibo', sel, w_hwio)   # (3, W+2, Cin, W, Cout)
    if pad_output:
        r = jnp.pad(r, ((0, 0), (0, 0), (0, 0), (1, 1), (0, 0)))
        w_cols = W + 2
    else:
        w_cols = W
    return r.reshape(3, (W + 2) * cin, w_cols * cout)


def doubleconv_forward(x_nchw, params, eps=1e-5):
    """Matches doubleconv.forward (eval-mode BN): input/output NCHW float32."""
    N, Cin, H, W = x_nchw.shape
    C = params["w1"].shape[-1]

    # Fold BN scale into conv weights, keep only a per-channel bias.
    s1, b1 = _fold_bn(params["bn1"], eps)
    s2, b2 = _fold_bn(params["bn2"], eps)
    w1f = params["w1"].astype(jnp.float32) * s1      # (3,3,Cin,C)
    w2f = params["w2"].astype(jnp.float32) * s2      # (3,3,C,C)

    r1 = _lower_conv_weights(w1f, W, pad_output=True).astype(jnp.bfloat16)
    r2 = _lower_conv_weights(w2f, W, pad_output=False).astype(jnp.bfloat16)

    b1_ext = jnp.pad(jnp.tile(b1, W), (C, C)).reshape(1, (W + 2) * C)
    b1_ext = b1_ext.astype(jnp.float32)
    b2_t = jnp.tile(b2, W).reshape(1, W * C).astype(jnp.float32)

    # NCHW -> padded, row-flattened NHWC (lane axis = (W+2)*Cin), bf16 for MXU.
    x_nhwc = jnp.transpose(x_nchw, (0, 2, 3, 1)).astype(jnp.float32)
    xp = jnp.pad(x_nhwc, ((0, 0), (1, 1), (1, 1), (0, 0)))
    xp = xp.reshape(N, H + 2, (W + 2) * Cin).astype(jnp.bfloat16)

    kernel = functools.partial(_fused_doubleconv_kernel,
                               H=H, W=W, Cin=Cin, C=C)

    out = pl.pallas_call(
        kernel,
        out_shape=jax.ShapeDtypeStruct((N, H, W * C), jnp.float32),
        grid_spec=pltpu.PrefetchScalarGridSpec(
            num_scalar_prefetch=0,
            grid=(N,),
            in_specs=[
                pl.BlockSpec((1, H + 2, (W + 2) * Cin), lambda n: (n, 0, 0)),
                pl.BlockSpec((3, (W + 2) * Cin, (W + 2) * C),
                             lambda n: (0, 0, 0)),
                pl.BlockSpec((3, (W + 2) * C, W * C), lambda n: (0, 0, 0)),
                pl.BlockSpec((1, (W + 2) * C), lambda n: (0, 0)),
                pl.BlockSpec((1, W * C), lambda n: (0, 0)),
            ],
            out_specs=pl.BlockSpec((1, H, W * C), lambda n: (n, 0, 0)),
            scratch_shapes=[pltpu.VMEM((H + 2, (W + 2) * C), jnp.bfloat16)],
        ),
        compiler_params=pltpu.CompilerParams(
            dimension_semantics=("parallel",),
            vmem_limit_bytes=32 * 1024 * 1024,
        ),
    )(xp, r1, r2, b1_ext, b2_t)

    out = out.reshape(N, H, W, C)
    return jnp.transpose(out, (0, 3, 1, 2))           # back to NCHW


# --------------------------------------------------------------------------
# Params / reference / test harness
# --------------------------------------------------------------------------
def init_doubleconv_params(key, in_channels, out_channels):
    k1, k2 = jax.random.split(key)
    w1 = 0.1 * jax.random.normal(k1, (3, 3, in_channels, out_channels),
                                 dtype=jnp.float32)
    w2 = 0.1 * jax.random.normal(k2, (3, 3, out_channels, out_channels),
                                 dtype=jnp.float32)
    def bn(c):
        return dict(gamma=jnp.ones((c,), jnp.float32),
                    beta=jnp.zeros((c,), jnp.float32),
                    mean=jnp.zeros((c,), jnp.float32),
                    var=jnp.ones((c,), jnp.float32))
    return dict(w1=w1, bn1=bn(out_channels), w2=w2, bn2=bn(out_channels))


def _reference_forward(x_nchw, params, eps=1e-5):
    """Pure-JAX f32 reference (eval-mode BN) for a numerical sanity check."""
    x = jnp.transpose(x_nchw, (0, 2, 3, 1)).astype(jnp.float32)

    def stage(x, w, bn):
        y = jax.lax.conv_general_dilated(
            x, w, window_strides=(1, 1), padding="SAME",
            dimension_numbers=("NHWC", "HWIO", "NHWC"))
        s, b = _fold_bn(bn, eps)
        return jnp.maximum(y * s + b, 0.0)

    y = stage(x, params["w1"], params["bn1"])
    y = stage(y, params["w2"], params["bn2"])
    return jnp.transpose(y, (0, 3, 1, 2))


if __name__ == "__main__":
    key = jax.random.PRNGKey(0)
    kx, kp = jax.random.split(key)

    N, Cin, Cout, H, W = 2, 4, 8, 16, 16
    x = jax.random.normal(kx, (N, Cin, H, W), dtype=jnp.float32)
    params = init_doubleconv_params(kp, Cin, Cout)

    out = jax.jit(doubleconv_forward)(x, params)
    out = jax.block_until_ready(out)

    assert out.shape == (N, Cout, H, W), out.shape
    assert bool(jnp.all(out >= 0.0))              # ReLU output is non-negative
    assert bool(jnp.all(jnp.isfinite(out)))

    ref = _reference_forward(x, params)
    max_err = float(jnp.max(jnp.abs(out - ref)))
    assert max_err < 1e-1, f"max abs err vs reference too large: {max_err}"

    print("KERNEL_OK")
</pallas_src>

<mosaic_0001>
module attributes {stable_mosaic.version = 11 : i64} {
  func.func @_fused_doubleconv_kernel(%arg0: i32, %arg1: memref<1x18x72xbf16, #tpu.memory_space<vmem>>, %arg2: memref<3x72x144xbf16, #tpu.memory_space<vmem>>, %arg3: memref<3x144x128xbf16, #tpu.memory_space<vmem>>, %arg4: memref<1x144xf32, #tpu.memory_space<vmem>>, %arg5: memref<1x128xf32, #tpu.memory_space<vmem>>, %arg6: memref<1x16x128xf32, #tpu.memory_space<vmem>>, %arg7: memref<18x144xbf16, #tpu.memory_space<vmem>>) attributes {dimension_semantics = [#tpu.dimension_semantics<parallel>], iteration_bounds = array<i64: 2>, scalar_prefetch = 0 : i64, scratch_operands = 1 : i64, tpu.core_type = #tpu.core_type<tc>, window_params = [{transform_indices = @transform_0, window_bounds = array<i64: 1, 18, 72>}, {pipeline_mode = #tpu.pipeline_mode<synchronous>, transform_indices = @transform_1, window_bounds = array<i64: 3, 72, 144>}, {pipeline_mode = #tpu.pipeline_mode<synchronous>, transform_indices = @transform_2, window_bounds = array<i64: 3, 144, 128>}, {pipeline_mode = #tpu.pipeline_mode<synchronous>, transform_indices = @transform_3, window_bounds = array<i64: 1, 144>}, {pipeline_mode = #tpu.pipeline_mode<synchronous>, transform_indices = @transform_4, window_bounds = array<i64: 1, 128>}, {transform_indices = @transform_5, window_bounds = array<i64: 1, 16, 128>}]} {
    %cst = arith.constant 0.000000e+00 : f32
    %0 = vector.broadcast %cst : f32 to vector<16x144xf32>
    %c0 = arith.constant 0 : index
    %c0_0 = arith.constant 0 : index
    %c0_1 = arith.constant 0 : index
    %1 = vector.load %arg1[%c0, %c0_0, %c0_1] : memref<1x18x72xbf16, #tpu.memory_space<vmem>>, vector<1x16x72xbf16>
    %2 = vector.shape_cast %1 : vector<1x16x72xbf16> to vector<16x72xbf16>
    %c0_2 = arith.constant 0 : index
    %c0_3 = arith.constant 0 : index
    %c0_4 = arith.constant 0 : index
    %3 = vector.load %arg2[%c0_2, %c0_3, %c0_4] : memref<3x72x144xbf16, #tpu.memory_space<vmem>>, vector<1x72x144xbf16>
    %4 = vector.shape_cast %3 : vector<1x72x144xbf16> to vector<72x144xbf16>
    %cst_5 = arith.constant dense<0.000000e+00> : vector<16x144xf32>
    %5 = tpu.matmul %2, %4, %cst_5 {dimension_numbers = #tpu.dot_dimension_numbers<[1], [0], [0], [1], [0, 0, 1, 1], [], []>} : vector<16x72xbf16>, vector<72x144xbf16>, vector<16x144xf32> -> vector<16x144xf32>
    %6 = arith.addf %0, %5 : vector<16x144xf32>
    %c0_6 = arith.constant 0 : index
    %c1 = arith.constant 1 : index
    %c0_7 = arith.constant 0 : index
    %7 = vector.load %arg1[%c0_6, %c1, %c0_7] : memref<1x18x72xbf16, #tpu.memory_space<vmem>>, vector<1x16x72xbf16>
    %8 = vector.shape_cast %7 : vector<1x16x72xbf16> to vector<16x72xbf16>
    %c1_8 = arith.constant 1 : index
    %c0_9 = arith.constant 0 : index
    %c0_10 = arith.constant 0 : index
    %9 = vector.load %arg2[%c1_8, %c0_9, %c0_10] : memref<3x72x144xbf16, #tpu.memory_space<vmem>>, vector<1x72x144xbf16>
    %10 = vector.shape_cast %9 : vector<1x72x144xbf16> to vector<72x144xbf16>
    %cst_11 = arith.constant dense<0.000000e+00> : vector<16x144xf32>
    %11 = tpu.matmul %8, %10, %cst_11 {dimension_numbers = #tpu.dot_dimension_numbers<[1], [0], [0], [1], [0, 0, 1, 1], [], []>} : vector<16x72xbf16>, vector<72x144xbf16>, vector<16x144xf32> -> vector<16x144xf32>
    %12 = arith.addf %6, %11 : vector<16x144xf32>
    %c0_12 = arith.constant 0 : index
    %c2 = arith.constant 2 : index
    %c0_13 = arith.constant 0 : index
    %13 = vector.load %arg1[%c0_12, %c2, %c0_13] : memref<1x18x72xbf16, #tpu.memory_space<vmem>>, vector<1x16x72xbf16>
    %14 = vector.shape_cast %13 : vector<1x16x72xbf16> to vector<16x72xbf16>
    %c2_14 = arith.constant 2 : index
    %c0_15 = arith.constant 0 : index
    %c0_16 = arith.constant 0 : index
    %15 = vector.load %arg2[%c2_14, %c0_15, %c0_16] : memref<3x72x144xbf16, #tpu.memory_space<vmem>>, vector<1x72x144xbf16>
    %16 = vector.shape_cast %15 : vector<1x72x144xbf16> to vector<72x144xbf16>
    %cst_17 = arith.constant dense<0.000000e+00> : vector<16x144xf32>
    %17 = tpu.matmul %14, %16, %cst_17 {dimension_numbers = #tpu.dot_dimension_numbers<[1], [0], [0], [1], [0, 0, 1, 1], [], []>} : vector<16x72xbf16>, vector<72x144xbf16>, vector<16x144xf32> -> vector<16x144xf32>
    %18 = arith.addf %12, %17 : vector<16x144xf32>
    %c0_18 = arith.constant 0 : index
    %c0_19 = arith.constant 0 : index
    %19 = vector.load %arg4[%c0_18, %c0_19] : memref<1x144xf32, #tpu.memory_space<vmem>>, vector<1x144xf32>
    %20 = vector.broadcast %19 : vector<1x144xf32> to vector<16x144xf32>
    %21 = arith.addf %18, %20 : vector<16x144xf32>
    %cst_20 = arith.constant 0.000000e+00 : f32
    %22 = vector.broadcast %cst_20 : f32 to vector<16x144xf32>
    %23 = arith.maximumf %21, %22 : vector<16x144xf32>
    %cst_21 = arith.constant 0.000000e+00 : bf16
    %24 = vector.broadcast %cst_21 : bf16 to vector<18x144xbf16>
    %c0_22 = arith.constant 0 : index
    %c0_23 = arith.constant 0 : index
    %25 = vector.load %arg7[%c0_22, %c0_23] : memref<18x144xbf16, #tpu.memory_space<vmem>>, vector<18x144xbf16>
    tpu.vector_store %arg7[%c0_22, %c0_23], %24 {strides = array<i32>} : memref<18x144xbf16, #tpu.memory_space<vmem>>, vector<18x144xbf16>,
    %26 = arith.truncf %23 : vector<16x144xf32> to vector<16x144xbf16>
    %c1_24 = arith.constant 1 : index
    %c0_25 = arith.constant 0 : index
    %27 = vector.load %arg7[%c1_24, %c0_25] : memref<18x144xbf16, #tpu.memory_space<vmem>>, vector<16x144xbf16>
    tpu.vector_store %arg7[%c1_24, %c0_25], %26 {strides = array<i32>} : memref<18x144xbf16, #tpu.memory_space<vmem>>, vector<16x144xbf16>,
    %cst_26 = arith.constant 0.000000e+00 : f32
    %28 = vector.broadcast %cst_26 : f32 to vector<16x128xf32>
    %c0_27 = arith.constant 0 : index
    %c0_28 = arith.constant 0 : index
    %29 = vector.load %arg7[%c0_27, %c0_28] : memref<18x144xbf16, #tpu.memory_space<vmem>>, vector<16x144xbf16>
    %c0_29 = arith.constant 0 : index
    %c0_30 = arith.constant 0 : index
    %c0_31 = arith.constant 0 : index
    %30 = vector.load %arg3[%c0_29, %c0_30, %c0_31] : memref<3x144x128xbf16, #tpu.memory_space<vmem>>, vector<1x144x128xbf16>
    %31 = vector.shape_cast %30 : vector<1x144x128xbf16> to vector<144x128xbf16>
    %cst_32 = arith.constant dense<0.000000e+00> : vector<16x128xf32>
    %32 = tpu.matmul %29, %31, %cst_32 {dimension_numbers = #tpu.dot_dimension_numbers<[1], [0], [0], [1], [0, 0, 1, 1], [], []>} : vector<16x144xbf16>, vector<144x128xbf16>, vector<16x128xf32> -> vector<16x128xf32>
    %33 = arith.addf %28, %32 : vector<16x128xf32>
    %c1_33 = arith.constant 1 : index
    %c0_34 = arith.constant 0 : index
    %34 = vector.load %arg7[%c1_33, %c0_34] : memref<18x144xbf16, #tpu.memory_space<vmem>>, vector<16x144xbf16>
    %c1_35 = arith.constant 1 : index
    %c0_36 = arith.constant 0 : index
    %c0_37 = arith.constant 0 : index
    %35 = vector.load %arg3[%c1_35, %c0_36, %c0_37] : memref<3x144x128xbf16, #tpu.memory_space<vmem>>, vector<1x144x128xbf16>
    %36 = vector.shape_cast %35 : vector<1x144x128xbf16> to vector<144x128xbf16>
    %cst_38 = arith.constant dense<0.000000e+00> : vector<16x128xf32>
    %37 = tpu.matmul %34, %36, %cst_38 {dimension_numbers = #tpu.dot_dimension_numbers<[1], [0], [0], [1], [0, 0, 1, 1], [], []>} : vector<16x144xbf16>, vector<144x128xbf16>, vector<16x128xf32> -> vector<16x128xf32>
    %38 = arith.addf %33, %37 : vector<16x128xf32>
    %c2_39 = arith.constant 2 : index
    %c0_40 = arith.constant 0 : index
    %39 = vector.load %arg7[%c2_39, %c0_40] : memref<18x144xbf16, #tpu.memory_space<vmem>>, vector<16x144xbf16>
    %c2_41 = arith.constant 2 : index
    %c0_42 = arith.constant 0 : index
    %c0_43 = arith.constant 0 : index
    %40 = vector.load %arg3[%c2_41, %c0_42, %c0_43] : memref<3x144x128xbf16, #tpu.memory_space<vmem>>, vector<1x144x128xbf16>
    %41 = vector.shape_cast %40 : vector<1x144x128xbf16> to vector<144x128xbf16>
    %cst_44 = arith.constant dense<0.000000e+00> : vector<16x128xf32>
    %42 = tpu.matmul %39, %41, %cst_44 {dimension_numbers = #tpu.dot_dimension_numbers<[1], [0], [0], [1], [0, 0, 1, 1], [], []>} : vector<16x144xbf16>, vector<144x128xbf16>, vector<16x128xf32> -> vector<16x128xf32>
    %43 = arith.addf %38, %42 : vector<16x128xf32>
    %c0_45 = arith.constant 0 : index
    %c0_46 = arith.constant 0 : index
    %44 = vector.load %arg5[%c0_45, %c0_46] : memref<1x128xf32, #tpu.memory_space<vmem>>, vector<1x128xf32>
    %45 = vector.broadcast %44 : vector<1x128xf32> to vector<16x128xf32>
    %46 = arith.addf %43, %45 : vector<16x128xf32>
    %cst_47 = arith.constant 0.000000e+00 : f32
    %47 = vector.broadcast %cst_47 : f32 to vector<16x128xf32>
    %48 = arith.maximumf %46, %47 : vector<16x128xf32>
    %49 = vector.shape_cast %48 : vector<16x128xf32> to vector<1x16x128xf32>
    %c0_48 = arith.constant 0 : index
    %c0_49 = arith.constant 0 : index
    %c0_50 = arith.constant 0 : index
    %50 = vector.load %arg6[%c0_48, %c0_49, %c0_50] : memref<1x16x128xf32, #tpu.memory_space<vmem>>, vector<1x16x128xf32>
    tpu.vector_store %arg6[%c0_48, %c0_49, %c0_50], %49 {strides = array<i32>} : memref<1x16x128xf32, #tpu.memory_space<vmem>>, vector<1x16x128xf32>,
    return
  }
  func.func @transform_0(%arg0: i32) -> (i32, i32, i32) {
    %c0_i32 = arith.constant 0 : i32
    %c0_i32_0 = arith.constant 0 : i32
    %c0_i32_1 = arith.constant 0 : i32
    return %arg0, %c0_i32, %c0_i32_0 : i32, i32, i32
  }
  func.func @transform_1(%arg0: i32) -> (i32, i32, i32) {
    %c0_i32 = arith.constant 0 : i32
    %c0_i32_0 = arith.constant 0 : i32
    %c0_i32_1 = arith.constant 0 : i32
    %c0_i32_2 = arith.constant 0 : i32
    return %c0_i32, %c0_i32_0, %c0_i32_1 : i32, i32, i32
  }
  func.func @transform_2(%arg0: i32) -> (i32, i32, i32) {
    %c0_i32 = arith.constant 0 : i32
    %c0_i32_0 = arith.constant 0 : i32
    %c0_i32_1 = arith.constant 0 : i32
    %c0_i32_2 = arith.constant 0 : i32
    return %c0_i32, %c0_i32_0, %c0_i32_1 : i32, i32, i32
  }
  func.func @transform_3(%arg0: i32) -> (i32, i32) {
    %c0_i32 = arith.constant 0 : i32
    %c0_i32_0 = arith.constant 0 : i32
    %c0_i32_1 = arith.constant 0 : i32
    return %c0_i32, %c0_i32_0 : i32, i32
  }
  func.func @transform_4(%arg0: i32) -> (i32, i32) {
    %c0_i32 = arith.constant 0 : i32
    %c0_i32_0 = arith.constant 0 : i32
    %c0_i32_1 = arith.constant 0 : i32
    return %c0_i32, %c0_i32_0 : i32, i32
  }
  func.func @transform_5(%arg0: i32) -> (i32, i32, i32) {
    %c0_i32 = arith.constant 0 : i32
    %c0_i32_0 = arith.constant 0 : i32
    %c0_i32_1 = arith.constant 0 : i32
    return %arg0, %c0_i32, %c0_i32_0 : i32, i32, i32
  }
}

</mosaic_0001>

<llo_original>
// kernel: tile.13
$region0: #{tile.13}
  #allocation0 [shape = 's32[1]{0}', space=sflag, size = 0x4, scoped, tag = 'scoped memory for tile.13']
  %s0 = inlined_call_operand.vmem [shape: f32[8], index: 0, kind: input, shape index: {}]
  %s1 = inlined_call_operand.vmem [shape: f32[16,8], index: 1, kind: output, shape index: {}]
  // Predicated region
  $region2: #{tile.13} parent=0 // pred_check
    _
  $region3: #{tile.13} parent=0 // pred_check_branch
    %3 = sbr.rel (0) target = $region5
  $region4: #{tile.13} parent=0 // pred_region
    _
  $region5: #{tile.13} parent=0 // pred_fallthru
    _
  %v4 = vld [vmem:[%s0] ss:$0 sm:$0xff]
  %5 = vst [vmem:[%s1] sm:$0xff] %v4
  %s6 = scalar_lea.vmem %s1, 8
  %7 = vst [vmem:[%s6] sm:$0xff] %v4

// kernel: tile.14
$region0: #{tile.14}
  %s0 = inlined_call_operand.vmem [shape: f32[16,8], index: 0, kind: input, shape index: {}]
  %s1 = inlined_call_operand.vmem [shape: f32[128], index: 1, kind: output, shape index: {}]
  $region1: #{tile.14} parent=0
    #allocation0 [shape = 'u8[4096]{0}', space=vmem, size = 0x1000, scoped, tag = 'scoped mem for output reshape']
    %v2 = vld [vmem:[%s0] sm:$0x1]
    %vm3 = vcmask 64512
    %4 = vst.msk [vmem:[#allocation0] sm:$0x1] %vm3, %v2
    %s5 = scalar_lea.vmem %s0, 15
    %v6 = vld [vmem:[%s5] sm:$0x1]
    %7 = vrot.lane.b32.xlu0 %v6, 120
    %v8 = vpop.permute.xlu0 %7
    %vm9 = vcmask 1048512
    %10 = vst.msk [vmem:[#allocation0] sm:$0x1] %vm9, %v8
    %s11 = scalar_lea.vmem %s0, 14
    %v12 = vld [vmem:[%s11] sm:$0x1]
    %13 = vrot.lane.b32.xlu0 %v12, 112
    %v14 = vpop.permute.xlu0 %13
    %vm15 = vcmask 982912
    %16 = vst.msk [vmem:[#allocation0] sm:$0x1] %vm15, %v14
    %s17 = scalar_lea.vmem %s0, 13
    %v18 = vld [vmem:[%s17] sm:$0x1]
    %19 = vrot.lane.b32.xlu0 %v18, 104
    %v20 = vpop.permute.xlu0 %19
    %vm21 = vcmask 917312
    %22 = vst.msk [vmem:[#allocation0] sm:$0x1] %vm21, %v20
    %s23 = scalar_lea.vmem %s0, 12
    %v24 = vld [vmem:[%s23] sm:$0x1]
    %25 = vrot.lane.b32.xlu0 %v24, 96
    %v26 = vpop.permute.xlu0 %25
    %vm27 = vcmask 851712
    %28 = vst.msk [vmem:[#allocation0] sm:$0x1] %vm27, %v26
    %s29 = scalar_lea.vmem %s0, 11
    %v30 = vld [vmem:[%s29] sm:$0x1]
    %31 = vrot.lane.b32.xlu0 %v30, 88
    %v32 = vpop.permute.xlu0 %31
    %vm33 = vcmask 786112
    %34 = vst.msk [vmem:[#allocation0] sm:$0x1] %vm33, %v32
    %s35 = scalar_lea.vmem %s0, 10
    %v36 = vld [vmem:[%s35] sm:$0x1]
    %37 = vrot.lane.b32.xlu0 %v36, 80
    %v38 = vpop.permute.xlu0 %37
    %vm39 = vcmask 720512
    %40 = vst.msk [vmem:[#allocation0] sm:$0x1] %vm39, %v38
    %s41 = scalar_lea.vmem %s0, 9
    %v42 = vld [vmem:[%s41] sm:$0x1]
    %43 = vrot.lane.b32.xlu0 %v42, 72
    %v44 = vpop.permute.xlu0 %43
    %vm45 = vcmask 654912
    %46 = vst.msk [vmem:[#allocation0] sm:$0x1] %vm45, %v44
    %s47 = scalar_lea.vmem %s0, 8
    %v48 = vld [vmem:[%s47] sm:$0x1]
    %49 = vrot.lane.b32.xlu0 %v48, 64
    %v50 = vpop.permute.xlu0 %49
    %vm51 = vcmask 589312
    %52 = vst.msk [vmem:[#allocation0] sm:$0x1] %vm51, %v50
    %s53 = scalar_lea.vmem %s0, 7
    %v54 = vld [vmem:[%s53] sm:$0x1]
    %55 = vrot.lane.b32.xlu0 %v54, 56
    %v56 = vpop.permute.xlu0 %55
    %vm57 = vcmask 523712
    %58 = vst.msk [vmem:[#allocation0] sm:$0x1] %vm57, %v56
    %s59 = scalar_lea.vmem %s0, 6
    %v60 = vld [vmem:[%s59] sm:$0x1]
    %61 = vrot.lane.b32.xlu0 %v60, 48
    %v62 = vpop.permute.xlu0 %61
    %vm63 = vcmask 458112
    %64 = vst.msk [vmem:[#allocation0] sm:$0x1] %vm63, %v62
    %s65 = scalar_lea.vmem %s0, 5
    %v66 = vld [vmem:[%s65] sm:$0x1]
    %67 = vrot.lane.b32.xlu0 %v66, 40
    %v68 = vpop.permute.xlu0 %67
    %vm69 = vcmask 392512
    %70 = vst.msk [vmem:[#allocation0] sm:$0x1] %vm69, %v68
    %s71 = scalar_lea.vmem %s0, 4
    %v72 = vld [vmem:[%s71] sm:$0x1]
    %73 = vrot.lane.b32.xlu0 %v72, 32
    %v74 = vpop.permute.xlu0 %73
    %vm75 = vcmask 326912
    %76 = vst.msk [vmem:[#allocation0] sm:$0x1] %vm75, %v74
    %s77 = scalar_lea.vmem %s0, 3
    %v78 = vld [vmem:[%s77] sm:$0x1]
    %79 = vrot.lane.b32.xlu0 %v78, 24
    %v80 = vpop.permute.xlu0 %79
    %vm81 = vcmask 261312
    %82 = vst.msk [vmem:[#allocation0] sm:$0x1] %vm81, %v80
    %s83 = scalar_lea.vmem %s0, 2
    %v84 = vld [vmem:[%s83] sm:$0x1]
    %85 = vrot.lane.b32.xlu0 %v84, 16
    %v86 = vpop.permute.xlu0 %85
    %vm87 = vcmask 195712
    %88 = vst.msk [vmem:[#allocation0] sm:$0x1] %vm87, %v86
    %s89 = scalar_lea.vmem %s0, 1
    %v90 = vld [vmem:[%s89] sm:$0x1]
    %91 = vrot.lane.b32.xlu0 %v90, 8
    %v92 = vpop.permute.xlu0 %91
    %vm93 = vcmask 130112
    %94 = vst.msk [vmem:[#allocation0] sm:$0x1] %vm93, %v92
    %s96 = sshll.u32 1, 1
    %s97 = ssub.s32 %s96, 1
    %v99 = vld [vmem:[#allocation0] sm:%s97]
    %s100 = sshll.u32 1, 1
    %s101 = ssub.s32 %s100, 1
    %102 = vst [vmem:[%s1] sm:%s101] %v99

// kernel: tile.19
$region0: #{tile.19}
  %s0 = inlined_call_operand.vmem [shape: f32[16,8], index: 0, kind: input, shape index: {}]
  %s1 = inlined_call_operand.vmem [shape: f32[1,128], index: 1, kind: output, shape index: {}]
  $region1: #{tile.19} parent=0
    #allocation0 [shape = 'u8[4096]{0}', space=vmem, size = 0x1000, scoped, tag = 'scoped mem for output reshape']
    %v2 = vld [vmem:[%s0] sm:$0x1]
    %vm3 = vcmask 64512
    %4 = vst.msk [vmem:[#allocation0] sm:$0x1] %vm3, %v2
    %s5 = scalar_lea.vmem %s0, 15
    %v6 = vld [vmem:[%s5] sm:$0x1]
    %7 = vrot.lane.b32.xlu0 %v6, 120
    %v8 = vpop.permute.xlu0 %7
    %vm9 = vcmask 1048512
    %10 = vst.msk [vmem:[#allocation0] sm:$0x1] %vm9, %v8
    %s11 = scalar_lea.vmem %s0, 14
    %v12 = vld [vmem:[%s11] sm:$0x1]
    %13 = vrot.lane.b32.xlu0 %v12, 112
    %v14 = vpop.permute.xlu0 %13
    %vm15 = vcmask 982912
    %16 = vst.msk [vmem:[#allocation0] sm:$0x1] %vm15, %v14
    %s17 = scalar_lea.vmem %s0, 13
    %v18 = vld [vmem:[%s17] sm:$0x1]
    %19 = vrot.lane.b32.xlu0 %v18, 104
    %v20 = vpop.permute.xlu0 %19
    %vm21 = vcmask 917312
    %22 = vst.msk [vmem:[#allocation0] sm:$0x1] %vm21, %v20
    %s23 = scalar_lea.vmem %s0, 12
    %v24 = vld [vmem:[%s23] sm:$0x1]
    %25 = vrot.lane.b32.xlu0 %v24, 96
    %v26 = vpop.permute.xlu0 %25
    %vm27 = vcmask 851712
    %28 = vst.msk [vmem:[#allocation0] sm:$0x1] %vm27, %v26
    %s29 = scalar_lea.vmem %s0, 11
    %v30 = vld [vmem:[%s29] sm:$0x1]
    %31 = vrot.lane.b32.xlu0 %v30, 88
    %v32 = vpop.permute.xlu0 %31
    %vm33 = vcmask 786112
    %34 = vst.msk [vmem:[#allocation0] sm:$0x1] %vm33, %v32
    %s35 = scalar_lea.vmem %s0, 10
    %v36 = vld [vmem:[%s35] sm:$0x1]
    %37 = vrot.lane.b32.xlu0 %v36, 80
    %v38 = vpop.permute.xlu0 %37
    %vm39 = vcmask 720512
    %40 = vst.msk [vmem:[#allocation0] sm:$0x1] %vm39, %v38
    %s41 = scalar_lea.vmem %s0, 9
    %v42 = vld [vmem:[%s41] sm:$0x1]
    %43 = vrot.lane.b32.xlu0 %v42, 72
    %v44 = vpop.permute.xlu0 %43
    %vm45 = vcmask 654912
    %46 = vst.msk [vmem:[#allocation0] sm:$0x1] %vm45, %v44
    %s47 = scalar_lea.vmem %s0, 8
    %v48 = vld [vmem:[%s47] sm:$0x1]
    %49 = vrot.lane.b32.xlu0 %v48, 64
    %v50 = vpop.permute.xlu0 %49
    %vm51 = vcmask 589312
    %52 = vst.msk [vmem:[#allocation0] sm:$0x1] %vm51, %v50
    %s53 = scalar_lea.vmem %s0, 7
    %v54 = vld [vmem:[%s53] sm:$0x1]
    %55 = vrot.lane.b32.xlu0 %v54, 56
    %v56 = vpop.permute.xlu0 %55
    %vm57 = vcmask 523712
    %58 = vst.msk [vmem:[#allocation0] sm:$0x1] %vm57, %v56
    %s59 = scalar_lea.vmem %s0, 6
    %v60 = vld [vmem:[%s59] sm:$0x1]
    %61 = vrot.lane.b32.xlu0 %v60, 48
    %v62 = vpop.permute.xlu0 %61
    %vm63 = vcmask 458112
    %64 = vst.msk [vmem:[#allocation0] sm:$0x1] %vm63, %v62
    %s65 = scalar_lea.vmem %s0, 5
    %v66 = vld [vmem:[%s65] sm:$0x1]
    %67 = vrot.lane.b32.xlu0 %v66, 40
    %v68 = vpop.permute.xlu0 %67
    %vm69 = vcmask 392512
    %70 = vst.msk [vmem:[#allocation0] sm:$0x1] %vm69, %v68
    %s71 = scalar_lea.vmem %s0, 4
    %v72 = vld [vmem:[%s71] sm:$0x1]
    %73 = vrot.lane.b32.xlu0 %v72, 32
    %v74 = vpop.permute.xlu0 %73
    %vm75 = vcmask 326912
    %76 = vst.msk [vmem:[#allocation0] sm:$0x1] %vm75, %v74
    %s77 = scalar_lea.vmem %s0, 3
    %v78 = vld [vmem:[%s77] sm:$0x1]
    %79 = vrot.lane.b32.xlu0 %v78, 24
    %v80 = vpop.permute.xlu0 %79
    %vm81 = vcmask 261312
    %82 = vst.msk [vmem:[#allocation0] sm:$0x1] %vm81, %v80
    %s83 = scalar_lea.vmem %s0, 2
    %v84 = vld [vmem:[%s83] sm:$0x1]
    %85 = vrot.lane.b32.xlu0 %v84, 16
    %v86 = vpop.permute.xlu0 %85
    %vm87 = vcmask 195712
    %88 = vst.msk [vmem:[#allocation0] sm:$0x1] %vm87, %v86
    %s89 = scalar_lea.vmem %s0, 1
    %v90 = vld [vmem:[%s89] sm:$0x1]
    %91 = vrot.lane.b32.xlu0 %v90, 8
    %v92 = vpop.permute.xlu0 %91
    %vm93 = vcmask 130112
    %94 = vst.msk [vmem:[#allocation0] sm:$0x1] %vm93, %v92
    %s96 = sshll.u32 1, 1
    %s97 = ssub.s32 %s96, 1
    %v99 = vld [vmem:[#allocation0] sm:%s97]
    %s100 = sshll.u32 1, 1
    %s101 = ssub.s32 %s100, 1
    %102 = vst [vmem:[%s1] sm:%s101] %v99

// kernel: doubleconv_forward.1
$region0: #{doubleconv_forward.1}
  #allocation0 [shape = 'u32[]', space=smem, size = 0x4, offset = 0x4, fixed_abs, tag = 'smem constant byte address 0x4 - core index']
  #allocation1 [shape = 'u32[144,128]{1,0:T(1,128)}', space=vmem, size = 0x12000, scoped, tag = 'internal scratch']
  #allocation2 [shape = 'bf16[18,144]{1,0:T(8,128)(2,1)}', space=vmem, size = 0x3000, scoped, tag = 'scratch operand']
  %s0 = inlined_call_operand.vmem [shape: bf16[2,18,72], index: 0, kind: input, shape index: {}]
  %s1 = inlined_call_operand.vmem [shape: bf16[3,72,144], index: 1, kind: input, shape index: {}]
  %s2 = inlined_call_operand.vmem [shape: bf16[3,144,128], index: 2, kind: input, shape index: {}]
  %s3 = inlined_call_operand.vmem [shape: f32[1,144], index: 3, kind: input, shape index: {}]
  %s4 = inlined_call_operand.vmem [shape: f32[1,128], index: 4, kind: input, shape index: {}]
  %s5 = inlined_call_operand.vmem [shape: f32[2,16,128], index: 5, kind: output, shape index: {}]
  %s6 = sld [smem:[#allocation0]]
  $region53: #{doubleconv_forward.1} parent=0
    _
  %s8 = ssub.s32 1, %s6
  %s9 = scalar_select 0, %s8, %s6
  loop: start=0, step=1, limit=4
  $region2: #{doubleconv_forward.1} parent=0 // loop_pre_header
    _
  $region3: #{doubleconv_forward.1} parent=0 // loop_header
    %s11 = sphi 0, %s15
    %p12 = scmp.ge.s32.totalorder %s11, 4
    %s21 = sphi 0, %s23
    %s24 = sphi 0, %s21
    %s25 = sphi 0, %s24
    %s41 = sphi 0, %s25
    %s45 = sphi 0, %s45
    %s47 = sphi 0, %s45
    %s48 = sphi 0, %s47
    %s62 = sphi 0, %s48
    %s66 = sphi 0, %s66
    %s68 = sphi 0, %s66
    %s69 = sphi 0, %s68
    %s83 = sphi 0, %s69
    %s87 = sphi 0, %s87
    %s89 = sphi 0, %s87
    %s90 = sphi 0, %s89
    %s104 = sphi 0, %s90
    %s108 = sphi 0, %s108
    %s110 = sphi 0, %s108
    %s111 = sphi 0, %s110
    %s125 = sphi 0, %s111
    %s131 = sphi 0, %s133
    %s134 = sphi 0, %s131
    %s135 = sphi 0, %s134
    %s151 = sphi 0, %s135
  $region4: #{doubleconv_forward.1} parent=0 // loop_header_branch
    %14 = sbr.rel (%p12) target = $region8
  $region5: #{doubleconv_forward.1} parent=0 // loop_body
    %s16 = ssub.s32 %s11, 1
    %s17 = ssub.s32 %s11, 2
    %s18 = sadd.s32 %s11, 1
    %s19 = ssub.s32 %s11, %s18
    %p20 = scmp.eq.s32.totalorder %s19, 0
    %s22 = sadd.s32 %s21, 1
    %s23 = scalar_select %p20, %s21, %s22
    %p26 = pneg %p20
    %p27 = scmp.eq.s32.totalorder %s11, 1
    %p28 = por %p26, %p27
    %p29 = scmp.ne.s32.totalorder %s21, %s24
    %p30 = scmp.eq.s32.totalorder %s11, 0
    %p31 = por %p29, %p30
    %p32 = scmp.ne.s32.totalorder %s21, %s24
    %p33 = scmp.eq.s32.totalorder %s16, 1
    %p34 = por %p32, %p33
    %p35 = scmp.ne.s32.totalorder %s24, %s25
    %p36 = scmp.eq.s32.totalorder %s16, 0
    %p37 = por %p35, %p36
    %p38 = scmp.ne.s32.totalorder %s24, %s25
    %p39 = scmp.eq.s32.totalorder %s17, 1
    %p40 = por %p38, %p39
    %p42 = scmp.ne.s32.totalorder %s25, %s41
    %p43 = scmp.eq.s32.totalorder %s17, 0
    %p44 = por %p42, %p43
    %s46 = sadd.s32 %s45, 1
    %p49 = scmp.eq.s32.totalorder %s11, 1
    %p50 = scmp.ne.s32.totalorder %s45, %s47
    %p51 = scmp.eq.s32.totalorder %s11, 0
    %p52 = por %p50, %p51
    %p53 = scmp.ne.s32.totalorder %s45, %s47
    %p54 = scmp.eq.s32.totalorder %s16, 1
    %p55 = por %p53, %p54
    %p56 = scmp.ne.s32.totalorder %s47, %s48
    %p57 = scmp.eq.s32.totalorder %s16, 0
    %p58 = por %p56, %p57
    %p59 = scmp.ne.s32.totalorder %s47, %s48
    %p60 = scmp.eq.s32.totalorder %s17, 1
    %p61 = por %p59, %p60
    %p63 = scmp.ne.s32.totalorder %s48, %s62
    %p64 = scmp.eq.s32.totalorder %s17, 0
    %p65 = por %p63, %p64
    %s67 = sadd.s32 %s66, 1
    %p70 = scmp.eq.s32.totalorder %s11, 1
    %p71 = scmp.ne.s32.totalorder %s66, %s68
    %p72 = scmp.eq.s32.totalorder %s11, 0
    %p73 = por %p71, %p72
    %p74 = scmp.ne.s32.totalorder %s66, %s68
    %p75 = scmp.eq.s32.totalorder %s16, 1
    %p76 = por %p74, %p75
    %p77 = scmp.ne.s32.totalorder %s68, %s69
    %p78 = scmp.eq.s32.totalorder %s16, 0
    %p79 = por %p77, %p78
    %p80 = scmp.ne.s32.totalorder %s68, %s69
    %p81 = scmp.eq.s32.totalorder %s17, 1
    %p82 = por %p80, %p81
    %p84 = scmp.ne.s32.totalorder %s69, %s83
    %p85 = scmp.eq.s32.totalorder %s17, 0
    %p86 = por %p84, %p85
    %s88 = sadd.s32 %s87, 1
    %p91 = scmp.eq.s32.totalorder %s11, 1
    %p92 = scmp.ne.s32.totalorder %s87, %s89
    %p93 = scmp.eq.s32.totalorder %s11, 0
    %p94 = por %p92, %p93
    %p95 = scmp.ne.s32.totalorder %s87, %s89
    %p96 = scmp.eq.s32.totalorder %s16, 1
    %p97 = por %p95, %p96
    %p98 = scmp.ne.s32.totalorder %s89, %s90
    %p99 = scmp.eq.s32.totalorder %s16, 0
    %p100 = por %p98, %p99
    %p101 = scmp.ne.s32.totalorder %s89, %s90
    %p102 = scmp.eq.s32.totalorder %s17, 1
    %p103 = por %p101, %p102
    %p105 = scmp.ne.s32.totalorder %s90, %s104
    %p106 = scmp.eq.s32.totalorder %s17, 0
    %p107 = por %p105, %p106
    %s109 = sadd.s32 %s108, 1
    %p112 = scmp.eq.s32.totalorder %s11, 1
    %p113 = scmp.ne.s32.totalorder %s108, %s110
    %p114 = scmp.eq.s32.totalorder %s11, 0
    %p115 = por %p113, %p114
    %p116 = scmp.ne.s32.totalorder %s108, %s110
    %p117 = scmp.eq.s32.totalorder %s16, 1
    %p118 = por %p116, %p117
    %p119 = scmp.ne.s32.totalorder %s110, %s111
    %p120 = scmp.eq.s32.totalorder %s16, 0
    %p121 = por %p119, %p120
    %p122 = scmp.ne.s32.totalorder %s110, %s111
    %p123 = scmp.eq.s32.totalorder %s17, 1
    %p124 = por %p122, %p123
    %p126 = scmp.ne.s32.totalorder %s111, %s125
    %p127 = scmp.eq.s32.totalorder %s17, 0
    %p128 = por %p126, %p127
    %s129 = ssub.s32 %s11, %s18
    %p130 = scmp.eq.s32.totalorder %s129, 0
    %s132 = sadd.s32 %s131, 1
    %s133 = scalar_select %p130, %s131, %s132
    %p136 = pneg %p130
    %p137 = scmp.eq.s32.totalorder %s11, 1
    %p138 = por %p136, %p137
    %p139 = scmp.ne.s32.totalorder %s131, %s134
    %p140 = scmp.eq.s32.totalorder %s11, 0
    %p141 = por %p139, %p140
    %p142 = scmp.ne.s32.totalorder %s131, %s134
    %p143 = scmp.eq.s32.totalorder %s16, 1
    %p144 = por %p142, %p143
    %p145 = scmp.ne.s32.totalorder %s134, %s135
    %p146 = scmp.eq.s32.totalorder %s16, 0
    %p147 = por %p145, %p146
    %p148 = scmp.ne.s32.totalorder %s134, %s135
    %p149 = scmp.eq.s32.totalorder %s17, 1
    %p150 = por %p148, %p149
    %p152 = scmp.ne.s32.totalorder %s135, %s151
    %p153 = scmp.eq.s32.totalorder %s17, 0
    %p154 = por %p152, %p153
    %p155 = scmp.le.s32.totalorder 1, %s11
    %p156 = scmp.lt.s32.totalorder %s11, 3
    %p157 = pnand %p155, %p156
    %p158 = pneg %p157
    // Predicated region
    $region9: #{doubleconv_forward.1} parent=5 // pred_check
      _
    $region10: #{doubleconv_forward.1} parent=5 // pred_check_branch
      %160 = sbr.rel (%p157) target = $region12
    $region11: #{doubleconv_forward.1} parent=5 // pred_region
      %s161 = ssub.s32 %s11, 1
      // Predicated region
      $region13: #{doubleconv_forward.1} parent=11 // pred_check
        %p162 = pneg %p58
      $region14: #{doubleconv_forward.1} parent=11 // pred_check_branch
        %164 = sbr.rel (%p162) target = $region16
      $region15: #{doubleconv_forward.1} parent=11 // pred_region
        _
      $region16: #{doubleconv_forward.1} parent=11 // pred_fallthru
        _
      // Predicated region
      $region17: #{doubleconv_forward.1} parent=11 // pred_check
        %p165 = pneg %p79
      $region18: #{doubleconv_forward.1} parent=11 // pred_check_branch
        %167 = sbr.rel (%p165) target = $region20
      $region19: #{doubleconv_forward.1} parent=11 // pred_region
        _
      $region20: #{doubleconv_forward.1} parent=11 // pred_fallthru
        _
      // Predicated region
      $region21: #{doubleconv_forward.1} parent=11 // pred_check
        %p168 = pneg %p100
      $region22: #{doubleconv_forward.1} parent=11 // pred_check_branch
        %170 = sbr.rel (%p168) target = $region24
      $region23: #{doubleconv_forward.1} parent=11 // pred_region
        _
      $region24: #{doubleconv_forward.1} parent=11 // pred_fallthru
        _
      // Predicated region
      $region25: #{doubleconv_forward.1} parent=11 // pred_check
        %p171 = pneg %p121
      $region26: #{doubleconv_forward.1} parent=11 // pred_check_branch
        %173 = sbr.rel (%p171) target = $region28
      $region27: #{doubleconv_forward.1} parent=11 // pred_region
        _
      $region28: #{doubleconv_forward.1} parent=11 // pred_fallthru
        _
    $region12: #{doubleconv_forward.1} parent=5 // pred_fallthru
      _
    %p174 = scmp.lt.s32.totalorder %s11, 2
    // Predicated region
    $region29: #{doubleconv_forward.1} parent=5 // pred_check
      %p175 = pneg %p174
    $region30: #{doubleconv_forward.1} parent=5 // pred_check_branch
      %177 = sbr.rel (%p175) target = $region32
    $region31: #{doubleconv_forward.1} parent=5 // pred_region
      // Predicated region
      $region33: #{doubleconv_forward.1} parent=31 // pred_check
        %p178 = pneg %p31
      $region34: #{doubleconv_forward.1} parent=31 // pred_check_branch
        %180 = sbr.rel (%p178) target = $region36
      $region35: #{doubleconv_forward.1} parent=31 // pred_region
        %p181 = scmp.lt.s32.totalorder %s11, 1
        %s182 = scalar_select %p181, %s11, 1
        %s183 = smul.addr %s182, 3
        %s184 = smul.addr %s183, 4
        %s185 = scalar_lea.vmem %s0, %s184
      $region36: #{doubleconv_forward.1} parent=31 // pred_fallthru
        _
    $region32: #{doubleconv_forward.1} parent=5 // pred_fallthru
      _
    %p186 = scmp.le.s32.totalorder 1, %s11
    %p187 = scmp.lt.s32.totalorder %s11, 3
    %p188 = pnand %p186, %p187
    %p189 = pneg %p188
    // Predicated region
    $region37: #{doubleconv_forward.1} parent=5 // pred_check
      _
    $region38: #{doubleconv_forward.1} parent=5 // pred_check_branch
      %191 = sbr.rel (%p188) target = $region40
    $region39: #{doubleconv_forward.1} parent=5 // pred_region
      %s192 = ssub.s32 %s11, 1
      %p193 = scmp.lt.s32.totalorder %s16, 1
      %s194 = scalar_select %p193, %s16, 1
      %s195 = smul.addr %s194, 3
      %s196 = smul.addr %s195, 4
      %s197 = scalar_lea.vmem %s0, %s196
      %p198 = pneg %p37
      %p199 = pneg %p34
      %p200 = pneg %p58
      %p201 = pneg %p55
      %p202 = pneg %p79
      %p203 = pneg %p76
      %p204 = pneg %p100
      %p205 = pneg %p97
      %p206 = pneg %p121
      %p207 = pneg %p118
      %p208 = pneg %p147
      %p209 = pneg %p144
      %p210 = scmp.lt.s32.totalorder %s16, 1
      %s211 = scalar_select %p210, %s16, 1
      %s212 = smul.addr %s211, 2
      %s213 = smul.addr %s212, 8
      %s214 = scalar_lea.vmem %s5, %s213
      %p215 = scmp.lt.s32.totalorder %s16, 1
      %s216 = scalar_select %p215, %s16, 1
      %s217 = smul.addr %s216, 3
      %s218 = smul.addr %s217, 4
      %s219 = scalar_lea.vmem %s0, %s218
      %p220 = scmp.lt.s32.totalorder %s16, 1
      %s221 = scalar_select %p220, %s16, 1
      %s222 = smul.addr %s221, 2
      %s223 = smul.addr %s222, 8
      %s224 = scalar_lea.vmem %s5, %s223
      %v226 = vld [vmem:[%s219] sm:$0xf]
      %v227 = vld [vmem:[%s219 + $0x4] sm:$0xf]
      %v228 = vld [vmem:[%s1] sm:$0xff]
      %v229 = vld [vmem:[%s1 + $0x8] sm:$0xff]
      %v230 = vld [vmem:[%s1 + $0x10] sm:$0xff]
      %v231 = vld [vmem:[%s1 + $0x18] sm:$0xff]
      %v232 = vld [vmem:[%s1 + $0x20] sm:$0xff]
      %v233 = vld [vmem:[%s1 + $0x28] sm:$0xff]
      %v234 = vld [vmem:[%s1 + $0x30] sm:$0xff]
      %v235 = vld [vmem:[%s1 + $0x38] sm:$0xff]
      %v236 = vld [vmem:[%s1 + $0x40] sm:$0xff]
      %v237 = vld [vmem:[%s219 + $0x8] sm:$0x1]
      %s238 = scalar_lea.vmem %s1, 72
      %v239 = vld [vmem:[%s238] sm:$0xff]
      %v240 = vld [vmem:[%s238 + $0x8] sm:$0xff]
      %v241 = vld [vmem:[%s238 + $0x10] sm:$0xff]
      %v242 = vld [vmem:[%s238 + $0x18] sm:$0xff]
      %v243 = vld [vmem:[%s238 + $0x20] sm:$0xff]
      %v244 = vld [vmem:[%s238 + $0x28] sm:$0xff]
      %v245 = vld [vmem:[%s238 + $0x30] sm:$0xff]
      %v246 = vld [vmem:[%s238 + $0x38] sm:$0xff]
      %v247 = vld [vmem:[%s238 + $0x40] sm:$0xff]
      %v251 = vunpack.c.l.b16 %v226
      %v252 = vunpack.c.l.b16 %v227
      %v253 = vunpack.c.l.b16 %v237
      %v254 = vpack.c.b16 %v252, %v251
      %v255 = vpack.c.b16 %v253, %v253
      %vm256 = vsmask.f32 7424
      %v258 = vshrl.u32 %v254, 16
      %v260 = vshll.u32 %v254, 16
      %v262 = vrot.slane %v260, 1
      %v263 = vor.u32 %v258, %v262
      %v265 = vshll.u32 %v255, 16
      %v267 = vrot.slane %v265, 1
      %v268 = vsel %vm256, %v263, %v267
      %v278 = vunpack.c.l.b16 %v239
      %v279 = vunpack.c.h.b16 %v239
      %v280 = vunpack.c.l.b16 %v240
      %v281 = vunpack.c.h.b16 %v240
      %v282 = vunpack.c.l.b16 %v241
      %v283 = vunpack.c.h.b16 %v241
      %v284 = vunpack.c.l.b16 %v242
      %v285 = vunpack.c.h.b16 %v242
      %v286 = vunpack.c.l.b16 %v243
      %v287 = vunpack.c.h.b16 %v243
      %v288 = vunpack.c.l.b16 %v244
      %v289 = vunpack.c.h.b16 %v244
      %v290 = vunpack.c.l.b16 %v245
      %v291 = vunpack.c.h.b16 %v245
      %v292 = vunpack.c.l.b16 %v246
      %v293 = vunpack.c.h.b16 %v246
      %v294 = vunpack.c.l.b16 %v247
      %v295 = vunpack.c.h.b16 %v247
      %v296 = vpack.c.b16 %v280, %v278
      %v297 = vpack.c.b16 %v281, %v279
      %v298 = vpack.c.b16 %v284, %v282
      %v299 = vpack.c.b16 %v285, %v283
      %v300 = vpack.c.b16 %v288, %v286
      %v301 = vpack.c.b16 %v289, %v287
      %v302 = vpack.c.b16 %v292, %v290
      %v303 = vpack.c.b16 %v293, %v291
      %v304 = vpack.c.b16 %v294, %v294
      %v305 = vpack.c.b16 %v295, %v295
      %vm314 = vcmask 588800
      %v316 = vsel %vm314, %v268, 0
      %vm318 = vcmask 1043456
      %v320 = vsel %vm318, %v304, 0
      %v323 = vsel %vm318, %v305, 0
      %325 = vmatprep.subr.bf16.mxu0 0
      %326 = vmatpush1.bf16.msra.mxu0 0
      %327 = vmatprep.subr.bf16.mxu0 0
      %328 = vmatpush1.bf16.msra.mxu0 0
      %329 = vmatprep.subr.bf16.mxu0 0
      %330 = vmatpush1.bf16.msra.mxu0 0
      %331 = vmatprep.subr.bf16.mxu0 %v323
      %332 = vmatpush1.bf16.msra.mxu0 %v320
      %333 = vmatprep.subr.bf16.mxu0 %v303
      %334 = vmatpush1.bf16.msra.mxu0 %v302
      %335 = vmatprep.subr.bf16.mxu0 %v301
      %336 = vmatpush1.bf16.msra.mxu0 %v300
      %337 = vmatprep.subr.bf16.mxu0 %v299
      %338 = vmatpush1.bf16.msra.mxu0 %v298
      %339 = vmatprep.subr.bf16.mxu0 %v297
      %340 = vmatpush1.bf16.msra.mxu0 %v296
      %341 = vmatprep.subr.bf16.mxu0 0
      %342 = vmatpush2.bf16.msra.mxu0 0
      %343 = vmatprep.subr.bf16.mxu0 0
      %344 = vmatpush2.bf16.msra.mxu0 0
      %345 = vmatprep.subr.bf16.mxu0 0
      %346 = vmatpush2.bf16.msra.mxu0 0
      %347 = vmatprep.subr.bf16.mxu0 0
      %348 = vmatpush2.bf16.msra.mxu0 0
      %349 = vmatprep.subr.bf16.mxu0 0
      %350 = vmatpush2.bf16.msra.mxu0 0
      %351 = vmatprep.subr.bf16.mxu0 0
      %352 = vmatpush2.bf16.msra.mxu0 0
      %353 = vmatprep.subr.bf16.mxu0 0
      %354 = vmatpush2.bf16.msra.mxu0 0
      %355 = vmatprep.subr.bf16.mxu0 0
      %356 = vmatpush2.bf16.msra.mxu0 0
      %357 = vmatprep.mubr.bf16.mxu0 0
      %358 = vmatmul.mubr.bf16.gmra.mxu0 %v316
      %v359 = vpop.f32.mrf.mxu0
      %v360 = vadd.f32 0.0, %v359
      %v361 = vpop.f32.mrf.mxu0
      %v362 = vadd.f32 0.0, %v361
      %v363 = vpop.f32.mrf.mxu0
      %v364 = vadd.f32 0.0, %v363
      %v365 = vpop.f32.mrf.mxu0
      %v366 = vadd.f32 0.0, %v365
      %367 = vdwg.mxu0
      %v377 = vunpack.c.l.b16 %v228
      %v378 = vunpack.c.h.b16 %v228
      %v379 = vunpack.c.l.b16 %v229
      %v380 = vunpack.c.h.b16 %v229
      %v381 = vunpack.c.l.b16 %v230
      %v382 = vunpack.c.h.b16 %v230
      %v383 = vunpack.c.l.b16 %v231
      %v384 = vunpack.c.h.b16 %v231
      %v385 = vunpack.c.l.b16 %v232
      %v386 = vunpack.c.h.b16 %v232
      %v387 = vunpack.c.l.b16 %v233
      %v388 = vunpack.c.h.b16 %v233
      %v389 = vunpack.c.l.b16 %v234
      %v390 = vunpack.c.h.b16 %v234
      %v391 = vunpack.c.l.b16 %v235
      %v392 = vunpack.c.h.b16 %v235
      %v393 = vunpack.c.l.b16 %v236
      %v394 = vunpack.c.h.b16 %v236
      %v395 = vpack.c.b16 %v379, %v377
      %v396 = vpack.c.b16 %v380, %v378
      %v397 = vpack.c.b16 %v383, %v381
      %v398 = vpack.c.b16 %v384, %v382
      %v399 = vpack.c.b16 %v387, %v385
      %v400 = vpack.c.b16 %v388, %v386
      %v401 = vpack.c.b16 %v391, %v389
      %v402 = vpack.c.b16 %v392, %v390
      %v403 = vpack.c.b16 %v393, %v393
      %v404 = vpack.c.b16 %v394, %v394
      %v413 = vsel %vm314, %v254, 0
      %v416 = vsel %vm318, %v403, 0
      %v419 = vsel %vm318, %v404, 0
      %421 = vmatprep.subr.bf16.mxu0 0
      %422 = vmatpush1.bf16.msra.mxu0 0
      %423 = vmatprep.subr.bf16.mxu0 0
      %424 = vmatpush1.bf16.msra.mxu0 0
      %425 = vmatprep.subr.bf16.mxu0 0
      %426 = vmatpush1.bf16.msra.mxu0 0
      %427 = vmatprep.subr.bf16.mxu0 %v419
      %428 = vmatpush1.bf16.msra.mxu0 %v416
      %429 = vmatprep.subr.bf16.mxu0 %v402
      %430 = vmatpush1.bf16.msra.mxu0 %v401
      %431 = vmatprep.subr.bf16.mxu0 %v400
      %432 = vmatpush1.bf16.msra.mxu0 %v399
      %433 = vmatprep.subr.bf16.mxu0 %v398
      %434 = vmatpush1.bf16.msra.mxu0 %v397
      %435 = vmatprep.subr.bf16.mxu0 %v396
      %436 = vmatpush1.bf16.msra.mxu0 %v395
      %437 = vmatprep.subr.bf16.mxu0 0
      %438 = vmatpush2.bf16.msra.mxu0 0
      %439 = vmatprep.subr.bf16.mxu0 0
      %440 = vmatpush2.bf16.msra.mxu0 0
      %441 = vmatprep.subr.bf16.mxu0 0
      %442 = vmatpush2.bf16.msra.mxu0 0
      %443 = vmatprep.subr.bf16.mxu0 0
      %444 = vmatpush2.bf16.msra.mxu0 0
      %445 = vmatprep.subr.bf16.mxu0 0
      %446 = vmatpush2.bf16.msra.mxu0 0
      %447 = vmatprep.subr.bf16.mxu0 0
      %448 = vmatpush2.bf16.msra.mxu0 0
      %449 = vmatprep.subr.bf16.mxu0 0
      %450 = vmatpush2.bf16.msra.mxu0 0
      %451 = vmatprep.subr.bf16.mxu0 0
      %452 = vmatpush2.bf16.msra.mxu0 0
      %453 = vmatprep.mubr.bf16.mxu0 0
      %454 = vmatmul.mubr.bf16.gmra.mxu0 %v413
      %v455 = vpop.f32.mrf.mxu0
      %v456 = vadd.f32 %v360, %v455
      %v457 = vpop.f32.mrf.mxu0
      %v458 = vadd.f32 %v362, %v457
      %v459 = vpop.f32.mrf.mxu0
      %v460 = vadd.f32 %v364, %v459
      %v461 = vpop.f32.mrf.mxu0
      %v462 = vadd.f32 %v366, %v461
      %463 = vdwg.mxu0
      %v464 = vld [vmem:[%s219] sm:$0xe]
      %s465 = scalar_lea.vmem %s1, 144
      %v466 = vld [vmem:[%s465] sm:$0xff]
      %v467 = vld [vmem:[%s465 + $0x8] sm:$0xff]
      %v468 = vld [vmem:[%s465 + $0x10] sm:$0xff]
      %v469 = vld [vmem:[%s465 + $0x18] sm:$0xff]
      %v470 = vld [vmem:[%s465 + $0x20] sm:$0xff]
      %v471 = vld [vmem:[%s465 + $0x28] sm:$0xff]
      %v472 = vld [vmem:[%s465 + $0x30] sm:$0xff]
      %v473 = vld [vmem:[%s465 + $0x38] sm:$0xff]
      %v474 = vld [vmem:[%s465 + $0x40] sm:$0xff]
      %v476 = vunpack.c.l.b16 %v464
      %v477 = vpack.c.b16 %v252, %v476
      %vm478 = vcmask 1046528
      %v479 = vrot.slane %v477, 1
      %v480 = vrot.slane %v255, 1
      %v481 = vsel %vm478, %v479, %v480
      %v491 = vunpack.c.l.b16 %v466
      %v492 = vunpack.c.h.b16 %v466
      %v493 = vunpack.c.l.b16 %v467
      %v494 = vunpack.c.h.b16 %v467
      %v495 = vunpack.c.l.b16 %v468
      %v496 = vunpack.c.h.b16 %v468
      %v497 = vunpack.c.l.b16 %v469
      %v498 = vunpack.c.h.b16 %v469
      %v499 = vunpack.c.l.b16 %v470
      %v500 = vunpack.c.h.b16 %v470
      %v501 = vunpack.c.l.b16 %v471
      %v502 = vunpack.c.h.b16 %v471
      %v503 = vunpack.c.l.b16 %v472
      %v504 = vunpack.c.h.b16 %v472
      %v505 = vunpack.c.l.b16 %v473
      %v506 = vunpack.c.h.b16 %v473
      %v507 = vunpack.c.l.b16 %v474
      %v508 = vunpack.c.h.b16 %v474
      %v509 = vpack.c.b16 %v493, %v491
      %v510 = vpack.c.b16 %v494, %v492
      %v511 = vpack.c.b16 %v497, %v495
      %v512 = vpack.c.b16 %v498, %v496
      %v513 = vpack.c.b16 %v501, %v499
      %v514 = vpack.c.b16 %v502, %v500
      %v515 = vpack.c.b16 %v505, %v503
      %v516 = vpack.c.b16 %v506, %v504
      %v517 = vpack.c.b16 %v507, %v507
      %v518 = vpack.c.b16 %v508, %v508
      %v528 = vsel %vm314, %v481, 0
      %v531 = vsel %vm318, %v517, 0
      %v534 = vsel %vm318, %v518, 0
      %536 = vmatprep.subr.bf16.mxu0 0
      %537 = vmatpush1.bf16.msra.mxu0 0
      %538 = vmatprep.subr.bf16.mxu0 0
      %539 = vmatpush1.bf16.msra.mxu0 0
      %540 = vmatprep.subr.bf16.mxu0 0
      %541 = vmatpush1.bf16.msra.mxu0 0
      %542 = vmatprep.subr.bf16.mxu0 %v534
      %543 = vmatpush1.bf16.msra.mxu0 %v531
      %544 = vmatprep.subr.bf16.mxu0 %v516
      %545 = vmatpush1.bf16.msra.mxu0 %v515
      %546 = vmatprep.subr.bf16.mxu0 %v514
      %547 = vmatpush1.bf16.msra.mxu0 %v513
      %548 = vmatprep.subr.bf16.mxu0 %v512
      %549 = vmatpush1.bf16.msra.mxu0 %v511
      %550 = vmatprep.subr.bf16.mxu0 %v510
      %551 = vmatpush1.bf16.msra.mxu0 %v509
      %552 = vmatprep.subr.bf16.mxu0 0
      %553 = vmatpush2.bf16.msra.mxu0 0
      %554 = vmatprep.subr.bf16.mxu0 0
      %555 = vmatpush2.bf16.msra.mxu0 0
      %556 = vmatprep.subr.bf16.mxu0 0
      %557 = vmatpush2.bf16.msra.mxu0 0
      %558 = vmatprep.subr.bf16.mxu0 0
      %559 = vmatpush2.bf16.msra.mxu0 0
      %560 = vmatprep.subr.bf16.mxu0 0
      %561 = vmatpush2.bf16.msra.mxu0 0
      %562 = vmatprep.subr.bf16.mxu0 0
      %563 = vmatpush2.bf16.msra.mxu0 0
      %564 = vmatprep.subr.bf16.mxu0 0
      %565 = vmatpush2.bf16.msra.mxu0 0
      %566 = vmatprep.subr.bf16.mxu0 0
      %567 = vmatpush2.bf16.msra.mxu0 0
      %568 = vmatprep.mubr.bf16.mxu0 0
      %569 = vmatmul.mubr.bf16.gmra.mxu0 %v528
      %v570 = vpop.f32.mrf.mxu0
      %v571 = vadd.f32 0.0, %v570
      %v572 = vpop.f32.mrf.mxu0
      %v573 = vadd.f32 0.0, %v572
      %v574 = vpop.f32.mrf.mxu0
      %v575 = vadd.f32 0.0, %v574
      %v576 = vpop.f32.mrf.mxu0
      %v577 = vadd.f32 0.0, %v576
      %578 = vdwg.mxu0
      %v579 = vadd.f32 %v456, %v571
      %v580 = vadd.f32 %v458, %v573
      %v581 = vadd.f32 %v460, %v575
      %v582 = vadd.f32 %v462, %v577
      %v583 = vld [vmem:[%s3] sm:$0x3]
      %v585 = vlaneseq
      %v586 = vshrl.u32 %v585, 7
      %v587 = vsub.s32 0, %v586
      %v588 = vrot.slane %v583, %v587
      %v589 = vlaneseq
      %v590 = vshrl.u32 %v589, 7
      %v591 = vsub.s32 1, %v590
      %v592 = vrot.slane %v583, %v591
      %v595 = vadd.f32 %v579, %v588
      %v596 = vadd.f32 %v580, %v592
      %v597 = vadd.f32 %v581, %v588
      %v598 = vadd.f32 %v582, %v592
      %v599 = vmax.f32 %v595, 0.0
      %v600 = vmax.f32 %v596, 0.0
      %v601 = vmax.f32 %v597, 0.0
      %v602 = vmax.f32 %v598, 0.0
      %vm603 = vcmask 130052
      %vm604 = vmor %vm603, %vm318
      %605 = vst.msk [vmem:[#allocation2] sm:$0xff] %vm604, 0
      %606 = vst.msk [vmem:[#allocation2 + $0x8] sm:$0xff] %vm604, 0
      %vm607 = vcmask 1040384
      %vm608 = vcmask 126980
      %vm609 = vmor %vm608, %vm607
      %610 = vst.msk [vmem:[#allocation2 + $0x10] sm:$0x11] %vm609, 0
      %v611 = vpack.c.bf16 %v601, %v599
      %v612 = vpack.c.bf16 %v602, %v600
      %v615 = vunpack.c.l.b16 %v611
      %v616 = vunpack.c.l.b16 %v612
      %v617 = vunpack.c.h.b16 %v611
      %v618 = vunpack.c.h.b16 %v612
      %v619 = vpack.c.b16 %v616, %v615
      %v620 = vpack.c.b16 %v618, %v617
      %vm621 = vsmask.f32 256
      %vm622 = vsmask.f32 4368
      %vm623 = vmor %vm621, %vm622
      %v625 = vshrl.u32 %v619, 16
      %v627 = vrot.slane %v625, 7
      %v628 = vshll.u32 %v619, 16
      %v630 = vor.u32 %v627, %v628
      %v631 = vrot.slane %v627, 4
      %v633 = vshrl.u32 %v620, 16
      %v635 = vrot.slane %v633, 7
      %v636 = vshll.u32 %v620, 16
      %v638 = vor.u32 %v635, %v636
      %v639 = vsel %vm623, %v631, %v638
      %v640 = vrot.slane %v635, 4
      %vm644 = vcmask 1043456
      %vm645 = vsmask.f32 7938
      %vm646 = vmand %vm644, %vm645
      %vm647 = vcmask 130052
      %vm648 = vsmask.f32 7954
      %vm649 = vmand %vm647, %vm648
      %vm650 = vmor %vm649, %vm646
      %v651 = vld [vmem:[#allocation2] sm:$0xff]
      %v652 = vsel %vm650, %v630, %v651
      %653 = vst [vmem:[#allocation2] sm:$0xff] %v652
      %654 = vst.msk [vmem:[#allocation2 + $0x8] sm:$0xff] %vm604, %v639
      %vm655 = vcmask 1040384
      %vm656 = vmand %vm655, %vm621
      %vm657 = vcmask 126980
      %vm658 = vsmask.f32 4352
      %vm659 = vmand %vm657, %vm658
      %vm660 = vmor %vm659, %vm656
      %v661 = vld [vmem:[#allocation2 + $0x10] sm:$0x11]
      %v662 = vsel %vm660, %v640, %v661
      %663 = vst [vmem:[#allocation2 + $0x10] sm:$0x11] %v662
      %v664 = vld [vmem:[#allocation2] sm:$0xff]
      %v665 = vld [vmem:[#allocation2 + $0x8] sm:$0xff]
      %v666 = vld [vmem:[%s2] sm:$0xf]
      %v667 = vld [vmem:[%s2 + $0x4] sm:$0xf]
      %v668 = vld [vmem:[%s2 + $0x8] sm:$0xf]
      %v669 = vld [vmem:[%s2 + $0xc] sm:$0xf]
      %v670 = vld [vmem:[%s2 + $0x10] sm:$0xf]
      %v671 = vld [vmem:[%s2 + $0x14] sm:$0xf]
      %v672 = vld [vmem:[%s2 + $0x18] sm:$0xf]
      %v673 = vld [vmem:[%s2 + $0x1c] sm:$0xf]
      %v674 = vld [vmem:[%s2 + $0x20] sm:$0xf]
      %v675 = vld [vmem:[%s2 + $0x24] sm:$0xf]
      %v676 = vld [vmem:[%s2 + $0x28] sm:$0xf]
      %v677 = vld [vmem:[%s2 + $0x2c] sm:$0xf]
      %v678 = vld [vmem:[%s2 + $0x30] sm:$0xf]
      %v679 = vld [vmem:[%s2 + $0x34] sm:$0xf]
      %v680 = vld [vmem:[%s2 + $0x38] sm:$0xf]
      %v681 = vld [vmem:[%s2 + $0x3c] sm:$0xf]
      %v682 = vld [vmem:[%s2 + $0x40] sm:$0xf]
      %v683 = vld [vmem:[%s2 + $0x44] sm:$0xf]
      %v684 = vld [vmem:[#allocation2 + $0x10] sm:$0x11]
      %s685 = scalar_lea.vmem %s2, 72
      %v686 = vld [vmem:[%s685] sm:$0xf]
      %v687 = vld [vmem:[%s685 + $0x4] sm:$0xf]
      %v688 = vld [vmem:[%s685 + $0x8] sm:$0xf]
      %v689 = vld [vmem:[%s685 + $0xc] sm:$0xf]
      %v690 = vld [vmem:[%s685 + $0x10] sm:$0xf]
      %v691 = vld [vmem:[%s685 + $0x14] sm:$0xf]
      %v692 = vld [vmem:[%s685 + $0x18] sm:$0xf]
      %v693 = vld [vmem:[%s685 + $0x1c] sm:$0xf]
      %v694 = vld [vmem:[%s685 + $0x20] sm:$0xf]
      %v695 = vld [vmem:[%s685 + $0x24] sm:$0xf]
      %v696 = vld [vmem:[%s685 + $0x28] sm:$0xf]
      %v697 = vld [vmem:[%s685 + $0x2c] sm:$0xf]
      %v698 = vld [vmem:[%s685 + $0x30] sm:$0xf]
      %v699 = vld [vmem:[%s685 + $0x34] sm:$0xf]
      %v700 = vld [vmem:[%s685 + $0x38] sm:$0xf]
      %v701 = vld [vmem:[%s685 + $0x3c] sm:$0xf]
      %v702 = vld [vmem:[%s685 + $0x40] sm:$0xf]
      %v703 = vld [vmem:[%s685 + $0x44] sm:$0xf]
      %v707 = vunpack.c.l.b16 %v664
      %v708 = vunpack.c.h.b16 %v664
      %v709 = vunpack.c.l.b16 %v665
      %v710 = vunpack.c.h.b16 %v665
      %v711 = vunpack.c.l.b16 %v684
      %v712 = vunpack.c.h.b16 %v684
      %v713 = vpack.c.b16 %v709, %v707
      %v714 = vpack.c.b16 %v710, %v708
      %v715 = vpack.c.b16 %v711, %v711
      %v716 = vpack.c.b16 %v712, %v712
      %v718 = vshrl.u32 %v713, 16
      %v720 = vshll.u32 %v713, 16
      %v722 = vrot.slane %v720, 1
      %v723 = vor.u32 %v718, %v722
      %v725 = vshll.u32 %v715, 16
      %v727 = vrot.slane %v725, 1
      %v728 = vsel %vm256, %v723, %v727
      %v730 = vshrl.u32 %v714, 16
      %v732 = vshll.u32 %v714, 16
      %v734 = vrot.slane %v732, 1
      %v735 = vor.u32 %v730, %v734
      %v737 = vshll.u32 %v716, 16
      %v739 = vrot.slane %v737, 1
      %v740 = vsel %vm256, %v735, %v739
      %v760 = vunpack.c.l.b16 %v686
      %v761 = vunpack.c.l.b16 %v687
      %v762 = vunpack.c.l.b16 %v688
      %v763 = vunpack.c.l.b16 %v689
      %v764 = vunpack.c.l.b16 %v690
      %v765 = vunpack.c.l.b16 %v691
      %v766 = vunpack.c.l.b16 %v692
      %v767 = vunpack.c.l.b16 %v693
      %v768 = vunpack.c.l.b16 %v694
      %v769 = vunpack.c.l.b16 %v695
      %v770 = vunpack.c.l.b16 %v696
      %v771 = vunpack.c.l.b16 %v697
      %v772 = vunpack.c.l.b16 %v698
      %v773 = vunpack.c.l.b16 %v699
      %v774 = vunpack.c.l.b16 %v700
      %v775 = vunpack.c.l.b16 %v701
      %v776 = vunpack.c.l.b16 %v702
      %v777 = vunpack.c.l.b16 %v703
      %v778 = vpack.c.b16 %v761, %v760
      %v779 = vpack.c.b16 %v763, %v762
      %v780 = vpack.c.b16 %v765, %v764
      %v781 = vpack.c.b16 %v767, %v766
      %v782 = vpack.c.b16 %v769, %v768
      %v783 = vpack.c.b16 %v771, %v770
      %v784 = vpack.c.b16 %v773, %v772
      %v785 = vpack.c.b16 %v775, %v774
      %v786 = vpack.c.b16 %v777, %v776
      %vm796 = vcmask 130048
      %v798 = vsel %vm796, %v740, 0
      %800 = vmatprep.subr.bf16.mxu0 0
      %801 = vmatpush1.bf16.msra.mxu0 %v785
      %802 = vmatprep.subr.bf16.mxu0 0
      %803 = vmatpush1.bf16.msra.mxu0 %v784
      %804 = vmatprep.subr.bf16.mxu0 0
      %805 = vmatpush1.bf16.msra.mxu0 %v783
      %806 = vmatprep.subr.bf16.mxu0 0
      %807 = vmatpush1.bf16.msra.mxu0 %v782
      %808 = vmatprep.subr.bf16.mxu0 0
      %809 = vmatpush1.bf16.msra.mxu0 %v781
      %810 = vmatprep.subr.bf16.mxu0 0
      %811 = vmatpush1.bf16.msra.mxu0 %v780
      %812 = vmatprep.subr.bf16.mxu0 0
      %813 = vmatpush1.bf16.msra.mxu0 %v779
      %814 = vmatprep.subr.bf16.mxu0 0
      %815 = vmatpush1.bf16.msra.mxu0 %v778
      %816 = vmatprep.subr.bf16.mxu0 0
      %817 = vmatpush2.bf16.msra.mxu0 0
      %818 = vmatprep.subr.bf16.mxu0 0
      %819 = vmatpush2.bf16.msra.mxu0 0
      %820 = vmatprep.subr.bf16.mxu0 0
      %821 = vmatpush2.bf16.msra.mxu0 0
      %822 = vmatprep.subr.bf16.mxu0 0
      %823 = vmatpush2.bf16.msra.mxu0 0
      %824 = vmatprep.subr.bf16.mxu0 0
      %825 = vmatpush2.bf16.msra.mxu0 0
      %826 = vmatprep.subr.bf16.mxu0 0
      %827 = vmatpush2.bf16.msra.mxu0 0
      %828 = vmatprep.subr.bf16.mxu0 0
      %829 = vmatpush2.bf16.msra.mxu0 0
      %830 = vmatprep.subr.bf16.mxu0 0
      %831 = vmatpush2.bf16.msra.mxu0 %v786
      %832 = vmatprep.mubr.bf16.mxu0 %v798
      %833 = vmatmul.mubr.bf16.gmra.mxu0 %v728
      %v834 = vpop.f32.mrf.mxu0
      %v835 = vadd.f32 0.0, %v834
      %v836 = vpop.f32.mrf.mxu0
      %v837 = vpop.f32.mrf.mxu0
      %v838 = vadd.f32 0.0, %v837
      %v839 = vpop.f32.mrf.mxu0
      %840 = vdwg.mxu0
      %v860 = vunpack.c.l.b16 %v666
      %v861 = vunpack.c.l.b16 %v667
      %v862 = vunpack.c.l.b16 %v668
      %v863 = vunpack.c.l.b16 %v669
      %v864 = vunpack.c.l.b16 %v670
      %v865 = vunpack.c.l.b16 %v671
      %v866 = vunpack.c.l.b16 %v672
      %v867 = vunpack.c.l.b16 %v673
      %v868 = vunpack.c.l.b16 %v674
      %v869 = vunpack.c.l.b16 %v675
      %v870 = vunpack.c.l.b16 %v676
      %v871 = vunpack.c.l.b16 %v677
      %v872 = vunpack.c.l.b16 %v678
      %v873 = vunpack.c.l.b16 %v679
      %v874 = vunpack.c.l.b16 %v680
      %v875 = vunpack.c.l.b16 %v681
      %v876 = vunpack.c.l.b16 %v682
      %v877 = vunpack.c.l.b16 %v683
      %v878 = vpack.c.b16 %v861, %v860
      %v879 = vpack.c.b16 %v863, %v862
      %v880 = vpack.c.b16 %v865, %v864
      %v881 = vpack.c.b16 %v867, %v866
      %v882 = vpack.c.b16 %v869, %v868
      %v883 = vpack.c.b16 %v871, %v870
      %v884 = vpack.c.b16 %v873, %v872
      %v885 = vpack.c.b16 %v875, %v874
      %v886 = vpack.c.b16 %v877, %v876
      %v896 = vsel %vm796, %v714, 0
      %898 = vmatprep.subr.bf16.mxu0 0
      %899 = vmatpush1.bf16.msra.mxu0 %v885
      %900 = vmatprep.subr.bf16.mxu0 0
      %901 = vmatpush1.bf16.msra.mxu0 %v884
      %902 = vmatprep.subr.bf16.mxu0 0
      %903 = vmatpush1.bf16.msra.mxu0 %v883
      %904 = vmatprep.subr.bf16.mxu0 0
      %905 = vmatpush1.bf16.msra.mxu0 %v882
      %906 = vmatprep.subr.bf16.mxu0 0
      %907 = vmatpush1.bf16.msra.mxu0 %v881
      %908 = vmatprep.subr.bf16.mxu0 0
      %909 = vmatpush1.bf16.msra.mxu0 %v880
      %910 = vmatprep.subr.bf16.mxu0 0
      %911 = vmatpush1.bf16.msra.mxu0 %v879
      %912 = vmatprep.subr.bf16.mxu0 0
      %913 = vmatpush1.bf16.msra.mxu0 %v878
      %914 = vmatprep.subr.bf16.mxu0 0
      %915 = vmatpush2.bf16.msra.mxu0 0
      %916 = vmatprep.subr.bf16.mxu0 0
      %917 = vmatpush2.bf16.msra.mxu0 0
      %918 = vmatprep.subr.bf16.mxu0 0
      %919 = vmatpush2.bf16.msra.mxu0 0
      %920 = vmatprep.subr.bf16.mxu0 0
      %921 = vmatpush2.bf16.msra.mxu0 0
      %922 = vmatprep.subr.bf16.mxu0 0
      %923 = vmatpush2.bf16.msra.mxu0 0
      %924 = vmatprep.subr.bf16.mxu0 0
      %925 = vmatpush2.bf16.msra.mxu0 0
      %926 = vmatprep.subr.bf16.mxu0 0
      %927 = vmatpush2.bf16.msra.mxu0 0
      %928 = vmatprep.subr.bf16.mxu0 0
      %929 = vmatpush2.bf16.msra.mxu0 %v886
      %930 = vmatprep.mubr.bf16.mxu0 %v896
      %931 = vmatmul.mubr.bf16.gmra.mxu0 %v713
      %v932 = vpop.f32.mrf.mxu0
      %v933 = vadd.f32 %v835, %v932
      %v934 = vpop.f32.mrf.mxu0
      %v935 = vpop.f32.mrf.mxu0
      %v936 = vadd.f32 %v838, %v935
      %v937 = vpop.f32.mrf.mxu0
      %938 = vdwg.mxu0
      %v939 = vld [vmem:[#allocation2] sm:$0xee]
      %s940 = scalar_lea.vmem %s2, 144
      %v941 = vld [vmem:[%s940] sm:$0xf]
      %v942 = vld [vmem:[%s940 + $0x4] sm:$0xf]
      %v943 = vld [vmem:[%s940 + $0x8] sm:$0xf]
      %v944 = vld [vmem:[%s940 + $0xc] sm:$0xf]
      %v945 = vld [vmem:[%s940 + $0x10] sm:$0xf]
      %v946 = vld [vmem:[%s940 + $0x14] sm:$0xf]
      %v947 = vld [vmem:[%s940 + $0x18] sm:$0xf]
      %v948 = vld [vmem:[%s940 + $0x1c] sm:$0xf]
      %v949 = vld [vmem:[%s940 + $0x20] sm:$0xf]
      %v950 = vld [vmem:[%s940 + $0x24] sm:$0xf]
      %v951 = vld [vmem:[%s940 + $0x28] sm:$0xf]
      %v952 = vld [vmem:[%s940 + $0x2c] sm:$0xf]
      %v953 = vld [vmem:[%s940 + $0x30] sm:$0xf]
      %v954 = vld [vmem:[%s940 + $0x34] sm:$0xf]
      %v955 = vld [vmem:[%s940 + $0x38] sm:$0xf]
      %v956 = vld [vmem:[%s940 + $0x3c] sm:$0xf]
      %v957 = vld [vmem:[%s940 + $0x40] sm:$0xf]
      %v958 = vld [vmem:[%s940 + $0x44] sm:$0xf]
      %v960 = vunpack.c.l.b16 %v939
      %v961 = vunpack.c.h.b16 %v939
      %v962 = vpack.c.b16 %v709, %v960
      %v963 = vpack.c.b16 %v710, %v961
      %v964 = vrot.slane %v962, 1
      %v965 = vrot.slane %v715, 1
      %v966 = vsel %vm478, %v964, %v965
      %v967 = vrot.slane %v963, 1
      %v968 = vrot.slane %v716, 1
      %v969 = vsel %vm478, %v967, %v968
      %v989 = vunpack.c.l.b16 %v941
      %v990 = vunpack.c.l.b16 %v942
      %v991 = vunpack.c.l.b16 %v943
      %v992 = vunpack.c.l.b16 %v944
      %v993 = vunpack.c.l.b16 %v945
      %v994 = vunpack.c.l.b16 %v946
      %v995 = vunpack.c.l.b16 %v947
      %v996 = vunpack.c.l.b16 %v948
      %v997 = vunpack.c.l.b16 %v949
      %v998 = vunpack.c.l.b16 %v950
      %v999 = vunpack.c.l.b16 %v951
      %v1000 = vunpack.c.l.b16 %v952
      %v1001 = vunpack.c.l.b16 %v953
      %v1002 = vunpack.c.l.b16 %v954
      %v1003 = vunpack.c.l.b16 %v955
      %v1004 = vunpack.c.l.b16 %v956
      %v1005 = vunpack.c.l.b16 %v957
      %v1006 = vunpack.c.l.b16 %v958
      %v1007 = vpack.c.b16 %v990, %v989
      %v1008 = vpack.c.b16 %v992, %v991
      %v1009 = vpack.c.b16 %v994, %v993
      %v1010 = vpack.c.b16 %v996, %v995
      %v1011 = vpack.c.b16 %v998, %v997
      %v1012 = vpack.c.b16 %v1000, %v999
      %v1013 = vpack.c.b16 %v1002, %v1001
      %v1014 = vpack.c.b16 %v1004, %v1003
      %v1015 = vpack.c.b16 %v1006, %v1005
      %v1026 = vsel %vm796, %v969, 0
      %1028 = vmatprep.subr.bf16.mxu0 0
      %1029 = vmatpush1.bf16.msra.mxu0 %v1014
      %1030 = vmatprep.subr.bf16.mxu0 0
      %1031 = vmatpush1.bf16.msra.mxu0 %v1013
      %1032 = vmatprep.subr.bf16.mxu0 0
      %1033 = vmatpush1.bf16.msra.mxu0 %v1012
      %1034 = vmatprep.subr.bf16.mxu0 0
      %1035 = vmatpush1.bf16.msra.mxu0 %v1011
      %1036 = vmatprep.subr.bf16.mxu0 0
      %1037 = vmatpush1.bf16.msra.mxu0 %v1010
      %1038 = vmatprep.subr.bf16.mxu0 0
      %1039 = vmatpush1.bf16.msra.mxu0 %v1009
      %1040 = vmatprep.subr.bf16.mxu0 0
      %1041 = vmatpush1.bf16.msra.mxu0 %v1008
      %1042 = vmatprep.subr.bf16.mxu0 0
      %1043 = vmatpush1.bf16.msra.mxu0 %v1007
      %1044 = vmatprep.subr.bf16.mxu0 0
      %1045 = vmatpush2.bf16.msra.mxu0 0
      %1046 = vmatprep.subr.bf16.mxu0 0
      %1047 = vmatpush2.bf16.msra.mxu0 0
      %1048 = vmatprep.subr.bf16.mxu0 0
      %1049 = vmatpush2.bf16.msra.mxu0 0
      %1050 = vmatprep.subr.bf16.mxu0 0
      %1051 = vmatpush2.bf16.msra.mxu0 0
      %1052 = vmatprep.subr.bf16.mxu0 0
      %1053 = vmatpush2.bf16.msra.mxu0 0
      %1054 = vmatprep.subr.bf16.mxu0 0
      %1055 = vmatpush2.bf16.msra.mxu0 0
      %1056 = vmatprep.subr.bf16.mxu0 0
      %1057 = vmatpush2.bf16.msra.mxu0 0
      %1058 = vmatprep.subr.bf16.mxu0 0
      %1059 = vmatpush2.bf16.msra.mxu0 %v1015
      %1060 = vmatprep.mubr.bf16.mxu0 %v1026
      %1061 = vmatmul.mubr.bf16.gmra.mxu0 %v966
      %v1062 = vpop.f32.mrf.mxu0
      %v1063 = vadd.f32 0.0, %v1062
      %v1064 = vpop.f32.mrf.mxu0
      %v1065 = vpop.f32.mrf.mxu0
      %v1066 = vadd.f32 0.0, %v1065
      %v1067 = vpop.f32.mrf.mxu0
      %1068 = vdwg.mxu0
      %v1069 = vadd.f32 %v933, %v1063
      %v1070 = vadd.f32 %v936, %v1066
      %v1071 = vld [vmem:[%s4] sm:$0x1]
      %v1073 = vlaneseq
      %v1074 = vshrl.u32 %v1073, 7
      %v1075 = vsub.s32 0, %v1074
      %v1076 = vrot.slane %v1071, %v1075
      %v1078 = vadd.f32 %v1069, %v1076
      %v1079 = vadd.f32 %v1070, %v1076
      %v1080 = vmax.f32 %v1078, 0.0
      %v1081 = vmax.f32 %v1079, 0.0
      %1082 = vst [vmem:[%s224] sm:$0xff] %v1080
      %1083 = vst [vmem:[%s224 + $0x8] sm:$0xff] %v1081
      %p1084 = scmp.lt.s32.totalorder %s16, 1
      %s1085 = scalar_select %p1084, %s16, 1
      %s1086 = smul.addr %s1085, 2
      %s1087 = smul.addr %s1086, 8
      %s1088 = scalar_lea.vmem %s5, %s1087
      // Predicated region
      $region41: #{doubleconv_forward.1} parent=39 // pred_check
        %p1089 = pneg %p144
      $region42: #{doubleconv_forward.1} parent=39 // pred_check_branch
        %1091 = sbr.rel (%p1089) target = $region44
      $region43: #{doubleconv_forward.1} parent=39 // pred_region
        _
      $region44: #{doubleconv_forward.1} parent=39 // pred_fallthru
        _
    $region40: #{doubleconv_forward.1} parent=5 // pred_fallthru
      _
    %p1092 = scmp.le.s32.totalorder 2, %s11
    // Predicated region
    $region45: #{doubleconv_forward.1} parent=5 // pred_check
      %p1093 = pneg %p1092
    $region46: #{doubleconv_forward.1} parent=5 // pred_check_branch
      %1095 = sbr.rel (%p1093) target = $region48
    $region47: #{doubleconv_forward.1} parent=5 // pred_region
      %s1096 = ssub.s32 %s11, 2
      // Predicated region
      $region49: #{doubleconv_forward.1} parent=47 // pred_check
        %p1097 = pneg %p150
      $region50: #{doubleconv_forward.1} parent=47 // pred_check_branch
        %1099 = sbr.rel (%p1097) target = $region52
      $region51: #{doubleconv_forward.1} parent=47 // pred_region
        %p1100 = scmp.lt.s32.totalorder %s17, 1
        %s1101 = scalar_select %p1100, %s17, 1
        %s1102 = smul.addr %s1101, 2
        %s1103 = smul.addr %s1102, 8
        %s1104 = scalar_lea.vmem %s5, %s1103
      $region52: #{doubleconv_forward.1} parent=47 // pred_fallthru
        _
    $region48: #{doubleconv_forward.1} parent=5 // pred_fallthru
      _
  $region6: #{doubleconv_forward.1} parent=0 // loop_footer
    %s15 = sadd.s32 1, %s11
  $region7: #{doubleconv_forward.1} parent=0 // loop_footer_branch
    %10 = sbr.rel target = $region3
  $region8: #{doubleconv_forward.1} parent=0 // loop_exit
    _

</llo_original>
